<compile_context>
chip_gen: v7x
topology: tpu7x:2x2x1
jax: 0.10.0
libtpu: 0.0.40
codegen_flags: <defaults>
</compile_context>

<pallas_src>
import jax
import jax.numpy as jnp
from jax.experimental import pallas as pl
from jax.experimental.pallas import tpu as pltpu


D_IN, D_H1, D_H2, D_OUT = 784, 256, 128, 10
D_OUT_PAD = 128  # lane-dense output width


def _round_up(x, m):
    return ((x + m - 1) // m) * m


def _choose_tb(B, tb_max=1024):
    """Batch tile: multiple of 16 (bf16 output sublane packing), capped at
    tb_max. For medium batches that would otherwise give grid=(1,), split so
    the grid has >=2 steps (megacore sharding on v7x + DMA/compute overlap),
    keeping TB >= 256 so the ~0.35us/step pipeline overhead stays <10%."""
    tb = min(tb_max, _round_up(max(B, 1), 16))
    if B > 256 and pl.cdiv(B, tb) < 2:
        tb = max(256, _round_up(pl.cdiv(B, 2), 16))
    return tb


def mlp_kernel(x_ref, w1_ref, b1_ref, w2_ref, b2_ref, w3_ref, b3_ref, o_ref):
    # x streamed in caller dtype (f32); cast to bf16 on the VPU (hidden under MXU).
    x = x_ref[...].astype(jnp.bfloat16)                                # (TB, 784)
    # fc1 + relu (f32 accumulate on MXU, bias/relu on VPU in f32)
    h1 = jnp.dot(x, w1_ref[...], preferred_element_type=jnp.float32) + b1_ref[...]
    h1 = jnp.maximum(h1, 0.0).astype(jnp.bfloat16)                     # (TB, 256)
    # fc2 + relu
    h2 = jnp.dot(h1, w2_ref[...], preferred_element_type=jnp.float32) + b2_ref[...]
    h2 = jnp.maximum(h2, 0.0).astype(jnp.bfloat16)                     # (TB, 128)
    # fc3 (no activation), 128-wide lane-dense bf16 store
    o = jnp.dot(h2, w3_ref[...], preferred_element_type=jnp.float32) + b3_ref[...]
    o_ref[...] = o.astype(jnp.bfloat16)


def prepare_params(params):
    """One-time conversion of f32 torch-style params to kernel operands:
    bf16 weights, f32 biases, fc3 weight/bias zero-padded to 128 output cols.
    Call once; reuse the result across forward calls."""
    w1, b1, w2, b2, w3, b3 = params
    return (
        w1.astype(jnp.bfloat16),
        b1.reshape(1, D_H1).astype(jnp.float32),
        w2.astype(jnp.bfloat16),
        b2.reshape(1, D_H2).astype(jnp.float32),
        jnp.pad(w3.astype(jnp.bfloat16), ((0, 0), (0, D_OUT_PAD - D_OUT))),
        jnp.pad(b3.reshape(1, D_OUT).astype(jnp.float32),
                ((0, 0), (0, D_OUT_PAD - D_OUT))),
    )


def simple_nn_forward(x, prepared_params, *, tb=1024):
    """x: (B, 1, 28, 28) or (B, 784), f32 or bf16. Returns (B, 10) float32."""
    w1b, b1f, w2b, b2f, w3b, b3f = prepared_params
    xb = x.reshape(-1, D_IN)                   # torch x.view(-1, 784); no dtype cast here
    B = xb.shape[0]
    if B == 0:
        return jnp.zeros((0, D_OUT), jnp.float32)

    TB = _choose_tb(B, tb)
    grid = (pl.cdiv(B, TB),)                   # ragged last block masked by Pallas

    # VMEM budget (bytes): double-buffered x tile (f32, 784->896 lane pad) and
    # bf16 out tile, resident bf16 weights + f32 biases (double-buffered by
    # Pallas), f32/bf16 activation temporaries; 2x headroom, capped at 32 MiB
    # (safe on v5e/v6e 128 MiB and v7x 64 MiB physical VMEM).
    x_tile = TB * 896 * 4
    o_tile = TB * D_OUT_PAD * 2
    weights = 2 * (2 * (D_IN * D_H1 + D_H1 * D_H2 + D_H2 * D_OUT_PAD)
                   + 4 * (D_H1 + D_H2 + D_OUT_PAD))
    acts = TB * (D_H1 + D_H2) * (4 + 2)
    vmem_bytes = 2 * (2 * x_tile + 2 * o_tile + weights + acts)
    vmem_bytes = min(max(vmem_bytes, 4 << 20), 32 << 20)

    out_pad = pl.pallas_call(
        mlp_kernel,
        out_shape=jax.ShapeDtypeStruct((B, D_OUT_PAD), jnp.bfloat16),
        grid_spec=pltpu.PrefetchScalarGridSpec(
            num_scalar_prefetch=0,
            grid=grid,
            in_specs=[
                pl.BlockSpec((TB, D_IN), lambda i: (i, 0)),         # x tile, streamed
                pl.BlockSpec((D_IN, D_H1), lambda i: (0, 0)),       # w1, resident
                pl.BlockSpec((1, D_H1), lambda i: (0, 0)),          # b1
                pl.BlockSpec((D_H1, D_H2), lambda i: (0, 0)),       # w2
                pl.BlockSpec((1, D_H2), lambda i: (0, 0)),          # b2
                pl.BlockSpec((D_H2, D_OUT_PAD), lambda i: (0, 0)),  # w3 (padded)
                pl.BlockSpec((1, D_OUT_PAD), lambda i: (0, 0)),     # b3 (padded)
            ],
            out_specs=pl.BlockSpec((TB, D_OUT_PAD), lambda i: (i, 0)),
        ),
        compiler_params=pltpu.CompilerParams(
            dimension_semantics=("parallel",),
            vmem_limit_bytes=int(vmem_bytes),
        ),
    )(xb, w1b, b1f, w2b, b2f, w3b, b3f)

    return out_pad[:B, :D_OUT].astype(jnp.float32)


def init_params(key):
    """Deterministic init mimicking torch.nn.Linear's uniform(-1/sqrt(in), 1/sqrt(in)).
    Weights stored as (in_features, out_features) so the kernel computes y = x @ W + b."""
    dims = [(D_IN, D_H1), (D_H1, D_H2), (D_H2, D_OUT)]
    params = []
    for i, (din, dout) in enumerate(dims):
        kw, kb = jax.random.split(jax.random.fold_in(key, i))
        bound = 1.0 / jnp.sqrt(float(din))
        w = jax.random.uniform(kw, (din, dout), jnp.float32, -bound, bound)
        b = jax.random.uniform(kb, (1, dout), jnp.float32, -bound, bound)
        params += [w, b]
    return tuple(params)


def _reference(x, params):
    w1, b1, w2, b2, w3, b3 = params
    xb = x.reshape(-1, D_IN).astype(jnp.float32)
    h1 = jnp.maximum(xb @ w1 + b1, 0.0)
    h2 = jnp.maximum(h1 @ w2 + b2, 0.0)
    return h2 @ w3 + b3


if __name__ == "__main__":
    key = jax.random.PRNGKey(0)
    kx, kp = jax.random.split(key)
    x = jax.random.normal(kx, (2, 1, 28, 28), jnp.float32)  # small NCHW batch
    params = init_params(kp)

    # One-time weight conversion (bf16 + fc3 padding), reused across calls.
    prepared = prepare_params(params)
    prepared = jax.block_until_ready(prepared)

    out = simple_nn_forward(x, prepared)
    out = jax.block_until_ready(out)

    ref = _reference(x, params)
    assert out.shape == (2, D_OUT)
    # bf16 operands / bf16 output (f32 accumulation) vs f32 reference -> relaxed tol.
    assert jnp.allclose(out, ref, atol=5e-2, rtol=5e-2), (
        float(jnp.max(jnp.abs(out - ref)))
    )

    print("KERNEL_OK")
</pallas_src>

<mosaic_0001>
module attributes {stable_mosaic.version = 11 : i64} {
  func.func @mlp_kernel(%arg0: i32, %arg1: memref<16x784xf32, #tpu.memory_space<vmem>>, %arg2: memref<784x256xbf16, #tpu.memory_space<vmem>>, %arg3: memref<1x256xf32, #tpu.memory_space<vmem>>, %arg4: memref<256x128xbf16, #tpu.memory_space<vmem>>, %arg5: memref<1x128xf32, #tpu.memory_space<vmem>>, %arg6: memref<128x128xbf16, #tpu.memory_space<vmem>>, %arg7: memref<1x128xf32, #tpu.memory_space<vmem>>, %arg8: memref<16x128xbf16, #tpu.memory_space<vmem>>) attributes {dimension_semantics = [#tpu.dimension_semantics<parallel>], iteration_bounds = array<i64: 1>, scalar_prefetch = 0 : i64, scratch_operands = 0 : i64, tpu.core_type = #tpu.core_type<tc>, window_params = [{transform_indices = @transform_0, window_bounds = array<i64: 16, 784>}, {pipeline_mode = #tpu.pipeline_mode<synchronous>, transform_indices = @transform_1, window_bounds = array<i64: 784, 256>}, {pipeline_mode = #tpu.pipeline_mode<synchronous>, transform_indices = @transform_2, window_bounds = array<i64: 1, 256>}, {pipeline_mode = #tpu.pipeline_mode<synchronous>, transform_indices = @transform_3, window_bounds = array<i64: 256, 128>}, {pipeline_mode = #tpu.pipeline_mode<synchronous>, transform_indices = @transform_4, window_bounds = array<i64: 1, 128>}, {pipeline_mode = #tpu.pipeline_mode<synchronous>, transform_indices = @transform_5, window_bounds = array<i64: 128, 128>}, {pipeline_mode = #tpu.pipeline_mode<synchronous>, transform_indices = @transform_6, window_bounds = array<i64: 1, 128>}, {transform_indices = @transform_7, window_bounds = array<i64: 16, 128>}]} {
    %c0 = arith.constant 0 : index
    %c0_0 = arith.constant 0 : index
    %0 = vector.load %arg1[%c0, %c0_0] : memref<16x784xf32, #tpu.memory_space<vmem>>, vector<16x784xf32>
    %1 = arith.truncf %0 : vector<16x784xf32> to vector<16x784xbf16>
    %c0_1 = arith.constant 0 : index
    %c0_2 = arith.constant 0 : index
    %2 = vector.load %arg2[%c0_1, %c0_2] : memref<784x256xbf16, #tpu.memory_space<vmem>>, vector<784x256xbf16>
    %cst = arith.constant dense<0.000000e+00> : vector<16x256xf32>
    %3 = tpu.matmul %1, %2, %cst {dimension_numbers = #tpu.dot_dimension_numbers<[1], [0], [0], [1], [0, 0, 1, 1], [], []>} : vector<16x784xbf16>, vector<784x256xbf16>, vector<16x256xf32> -> vector<16x256xf32>
    %c0_3 = arith.constant 0 : index
    %c0_4 = arith.constant 0 : index
    %4 = vector.load %arg3[%c0_3, %c0_4] : memref<1x256xf32, #tpu.memory_space<vmem>>, vector<1x256xf32>
    %5 = vector.broadcast %4 : vector<1x256xf32> to vector<16x256xf32>
    %6 = arith.addf %3, %5 : vector<16x256xf32>
    %cst_5 = arith.constant 0.000000e+00 : f32
    %7 = vector.broadcast %cst_5 : f32 to vector<16x256xf32>
    %8 = arith.maximumf %6, %7 : vector<16x256xf32>
    %9 = arith.truncf %8 : vector<16x256xf32> to vector<16x256xbf16>
    %c0_6 = arith.constant 0 : index
    %c0_7 = arith.constant 0 : index
    %10 = vector.load %arg4[%c0_6, %c0_7] : memref<256x128xbf16, #tpu.memory_space<vmem>>, vector<256x128xbf16>
    %cst_8 = arith.constant dense<0.000000e+00> : vector<16x128xf32>
    %11 = tpu.matmul %9, %10, %cst_8 {dimension_numbers = #tpu.dot_dimension_numbers<[1], [0], [0], [1], [0, 0, 1, 1], [], []>} : vector<16x256xbf16>, vector<256x128xbf16>, vector<16x128xf32> -> vector<16x128xf32>
    %c0_9 = arith.constant 0 : index
    %c0_10 = arith.constant 0 : index
    %12 = vector.load %arg5[%c0_9, %c0_10] : memref<1x128xf32, #tpu.memory_space<vmem>>, vector<1x128xf32>
    %13 = vector.broadcast %12 : vector<1x128xf32> to vector<16x128xf32>
    %14 = arith.addf %11, %13 : vector<16x128xf32>
    %cst_11 = arith.constant 0.000000e+00 : f32
    %15 = vector.broadcast %cst_11 : f32 to vector<16x128xf32>
    %16 = arith.maximumf %14, %15 : vector<16x128xf32>
    %17 = arith.truncf %16 : vector<16x128xf32> to vector<16x128xbf16>
    %c0_12 = arith.constant 0 : index
    %c0_13 = arith.constant 0 : index
    %18 = vector.load %arg6[%c0_12, %c0_13] : memref<128x128xbf16, #tpu.memory_space<vmem>>, vector<128x128xbf16>
    %cst_14 = arith.constant dense<0.000000e+00> : vector<16x128xf32>
    %19 = tpu.matmul %17, %18, %cst_14 {dimension_numbers = #tpu.dot_dimension_numbers<[1], [0], [0], [1], [0, 0, 1, 1], [], []>} : vector<16x128xbf16>, vector<128x128xbf16>, vector<16x128xf32> -> vector<16x128xf32>
    %c0_15 = arith.constant 0 : index
    %c0_16 = arith.constant 0 : index
    %20 = vector.load %arg7[%c0_15, %c0_16] : memref<1x128xf32, #tpu.memory_space<vmem>>, vector<1x128xf32>
    %21 = vector.broadcast %20 : vector<1x128xf32> to vector<16x128xf32>
    %22 = arith.addf %19, %21 : vector<16x128xf32>
    %23 = arith.truncf %22 : vector<16x128xf32> to vector<16x128xbf16>
    %c0_17 = arith.constant 0 : index
    %c0_18 = arith.constant 0 : index
    %24 = vector.load %arg8[%c0_17, %c0_18] : memref<16x128xbf16, #tpu.memory_space<vmem>>, vector<16x128xbf16>
    tpu.vector_store %arg8[%c0_17, %c0_18], %23 {strides = array<i32>} : memref<16x128xbf16, #tpu.memory_space<vmem>>, vector<16x128xbf16>,
    return
  }
  func.func @transform_0(%arg0: i32) -> (i32, i32) {
    %c0_i32 = arith.constant 0 : i32
    %c0_i32_0 = arith.constant 0 : i32
    return %arg0, %c0_i32 : i32, i32
  }
  func.func @transform_1(%arg0: i32) -> (i32, i32) {
    %c0_i32 = arith.constant 0 : i32
    %c0_i32_0 = arith.constant 0 : i32
    %c0_i32_1 = arith.constant 0 : i32
    return %c0_i32, %c0_i32_0 : i32, i32
  }
  func.func @transform_2(%arg0: i32) -> (i32, i32) {
    %c0_i32 = arith.constant 0 : i32
    %c0_i32_0 = arith.constant 0 : i32
    %c0_i32_1 = arith.constant 0 : i32
    return %c0_i32, %c0_i32_0 : i32, i32
  }
  func.func @transform_3(%arg0: i32) -> (i32, i32) {
    %c0_i32 = arith.constant 0 : i32
    %c0_i32_0 = arith.constant 0 : i32
    %c0_i32_1 = arith.constant 0 : i32
    return %c0_i32, %c0_i32_0 : i32, i32
  }
  func.func @transform_4(%arg0: i32) -> (i32, i32) {
    %c0_i32 = arith.constant 0 : i32
    %c0_i32_0 = arith.constant 0 : i32
    %c0_i32_1 = arith.constant 0 : i32
    return %c0_i32, %c0_i32_0 : i32, i32
  }
  func.func @transform_5(%arg0: i32) -> (i32, i32) {
    %c0_i32 = arith.constant 0 : i32
    %c0_i32_0 = arith.constant 0 : i32
    %c0_i32_1 = arith.constant 0 : i32
    return %c0_i32, %c0_i32_0 : i32, i32
  }
  func.func @transform_6(%arg0: i32) -> (i32, i32) {
    %c0_i32 = arith.constant 0 : i32
    %c0_i32_0 = arith.constant 0 : i32
    %c0_i32_1 = arith.constant 0 : i32
    return %c0_i32, %c0_i32_0 : i32, i32
  }
  func.func @transform_7(%arg0: i32) -> (i32, i32) {
    %c0_i32 = arith.constant 0 : i32
    %c0_i32_0 = arith.constant 0 : i32
    return %arg0, %c0_i32 : i32, i32
  }
}

</mosaic_0001>

<llo_original>
// kernel: tpu_custom_call.1
$region0: #{tpu_custom_call.1}
  #allocation0 [shape = 'u32[]', space=smem, size = 0x4, offset = 0x4, fixed_abs, tag = 'smem constant byte address 0x4 - core index']
  #allocation1 [shape = 'u32[144,128]{1,0:T(1,128)}', space=vmem, size = 0x12000, scoped, tag = 'internal scratch']
  %s0 = inlined_call_operand.hbm [shape: f32[2,784], index: 0, kind: input, shape index: {}]
  %s1 = inlined_call_operand.hbm [shape: bf16[784,256], index: 1, kind: input, shape index: {}]
  %s2 = inlined_call_operand.vmem [shape: f32[1,256], index: 2, kind: input, shape index: {}]
  %s3 = inlined_call_operand.hbm [shape: bf16[256,128], index: 3, kind: input, shape index: {}]
  %s4 = inlined_call_operand.vmem [shape: f32[1,128], index: 4, kind: input, shape index: {}]
  %s5 = inlined_call_operand.hbm [shape: bf16[128,128], index: 5, kind: input, shape index: {}]
  %s6 = inlined_call_operand.vmem [shape: f32[1,128], index: 6, kind: input, shape index: {}]
  %s7 = inlined_call_operand.hbm [shape: bf16[2,128], index: 7, kind: output, shape index: {}]
  %s8 = sld [smem:[#allocation0]]
  $region54: #{tpu_custom_call.1} parent=0
    _
  %s10 = ssub.s32 1, %s8
  %s11 = scalar_select 0, %s10, %s8
  $region1: #{tpu_custom_call.1} parent=0
    #allocation2 [shape = 'u8[57344]{0}', space=vmem, size = 0xe000, scoped, tag = 'input window, operand 0, single buffered']
    #allocation3 [shape = 's32[1]{0}', space=sflag, size = 0x4, scoped, tag = 'scoped memory for tpu_custom_call.1']
    #allocation4 [shape = 's32[1]{0}', space=sflag, size = 0x4, scoped, tag = 'scoped memory for tpu_custom_call.1']
    #allocation5 [shape = 'u8[401408]{0}', space=vmem, size = 0x62000, scoped, tag = 'input window, operand 1, single buffered']
    #allocation6 [shape = 's32[1]{0}', space=sflag, size = 0x4, scoped, tag = 'scoped memory for tpu_custom_call.1']
    #allocation7 [shape = 'u8[65536]{0}', space=vmem, size = 0x10000, scoped, tag = 'input window, operand 3, single buffered']
    #allocation8 [shape = 'u8[32768]{0}', space=vmem, size = 0x8000, scoped, tag = 'input window, operand 5, single buffered']
    #allocation9 [shape = 's32[1]{0}', space=sflag, size = 0x4, scoped, tag = 'scoped memory for tpu_custom_call.1']
    #allocation10 [shape = 'u8[4096]{0}', space=vmem, size = 0x1000, scoped, tag = 'output window, operand 0, single buffered']
    %12 = vsyncpa [#allocation3], 0
    %13 = vsyncpa [#allocation6], 0
    %14 = vsyncpa [#allocation9], 0
    %15 = vsyncpa [#allocation4], 0
    // Predicated region
    $region2: #{tpu_custom_call.1} parent=1 // pred_check
      _
    $region3: #{tpu_custom_call.1} parent=1 // pred_check_branch
      %17 = sbr.rel (0) target = $region5
    $region4: #{tpu_custom_call.1} parent=1 // pred_region
      %s19 = ssub.s32 1792, 224
      %20 = vsyncadd [#allocation3], %s19
      %s21 = sshll.u32 [#allocation2], 4
      %s22 = int_to_ptr.vmem [resolvable:$true] %s21
      %27 = dma.hbm_to_vmem [thread:$0]  %s0, 224, %s22, [#allocation3], 224, 224, 14
    $region5: #{tpu_custom_call.1} parent=1 // pred_fallthru
      _
    // Predicated region
    $region6: #{tpu_custom_call.1} parent=1 // pred_check
      _
    $region7: #{tpu_custom_call.1} parent=1 // pred_check_branch
      %29 = sbr.rel (0) target = $region9
    $region8: #{tpu_custom_call.1} parent=1 // pred_region
      %s31 = ssub.s32 12544, 12544
      %32 = vsyncadd [#allocation6], %s31
      %s33 = sshll.u32 [#allocation5], 4
      %s34 = int_to_ptr.vmem [resolvable:$true] %s33
      %39 = dma.hbm_to_vmem [thread:$0]  %s1, 12544, %s34, [#allocation6], 128, 128, 8
    $region9: #{tpu_custom_call.1} parent=1 // pred_fallthru
      _
    // Predicated region
    $region10: #{tpu_custom_call.1} parent=1 // pred_check
      _
    $region11: #{tpu_custom_call.1} parent=1 // pred_check_branch
      %41 = sbr.rel (0) target = $region13
    $region12: #{tpu_custom_call.1} parent=1 // pred_region
      _
    $region13: #{tpu_custom_call.1} parent=1 // pred_fallthru
      _
    // Predicated region
    $region14: #{tpu_custom_call.1} parent=1 // pred_check
      _
    $region15: #{tpu_custom_call.1} parent=1 // pred_check_branch
      %43 = sbr.rel (0) target = $region17
    $region16: #{tpu_custom_call.1} parent=1 // pred_region
      %s45 = ssub.s32 2048, 2048
      %46 = vsyncadd [#allocation6], %s45
      %s47 = sshll.u32 [#allocation7], 4
      %s48 = int_to_ptr.vmem [resolvable:$true] %s47
      %53 = dma.hbm_to_vmem [thread:$0]  %s3, 2048, %s48, [#allocation6], 64, 64, 4
    $region17: #{tpu_custom_call.1} parent=1 // pred_fallthru
      _
    // Predicated region
    $region18: #{tpu_custom_call.1} parent=1 // pred_check
      _
    $region19: #{tpu_custom_call.1} parent=1 // pred_check_branch
      %55 = sbr.rel (0) target = $region21
    $region20: #{tpu_custom_call.1} parent=1 // pred_region
      _
    $region21: #{tpu_custom_call.1} parent=1 // pred_fallthru
      _
    // Predicated region
    $region22: #{tpu_custom_call.1} parent=1 // pred_check
      _
    $region23: #{tpu_custom_call.1} parent=1 // pred_check_branch
      %57 = sbr.rel (0) target = $region25
    $region24: #{tpu_custom_call.1} parent=1 // pred_region
      %s59 = ssub.s32 1024, 1024
      %60 = vsyncadd [#allocation9], %s59
      %s61 = sshll.u32 [#allocation8], 4
      %s62 = int_to_ptr.vmem [resolvable:$true] %s61
      %67 = dma.hbm_to_vmem [thread:$0]  %s5, 1024, %s62, [#allocation9], 64, 64, 4
    $region25: #{tpu_custom_call.1} parent=1 // pred_fallthru
      _
    // Predicated region
    $region26: #{tpu_custom_call.1} parent=1 // pred_check
      _
    $region27: #{tpu_custom_call.1} parent=1 // pred_check_branch
      %69 = sbr.rel (0) target = $region29
    $region28: #{tpu_custom_call.1} parent=1 // pred_region
      _
    $region29: #{tpu_custom_call.1} parent=1 // pred_fallthru
      _
    // Predicated region
    $region30: #{tpu_custom_call.1} parent=1 // pred_check
      _
    $region31: #{tpu_custom_call.1} parent=1 // pred_check_branch
      %71 = sbr.rel (0) target = $region33
    $region32: #{tpu_custom_call.1} parent=1 // pred_region
      %72 = dma.done [#allocation3], 1792
    $region33: #{tpu_custom_call.1} parent=1 // pred_fallthru
      _
    // Predicated region
    $region34: #{tpu_custom_call.1} parent=1 // pred_check
      _
    $region35: #{tpu_custom_call.1} parent=1 // pred_check_branch
      %74 = sbr.rel (0) target = $region37
    $region36: #{tpu_custom_call.1} parent=1 // pred_region
      %75 = dma.done [#allocation6], 12544
    $region37: #{tpu_custom_call.1} parent=1 // pred_fallthru
      _
    // Predicated region
    $region38: #{tpu_custom_call.1} parent=1 // pred_check
      _
    $region39: #{tpu_custom_call.1} parent=1 // pred_check_branch
      %77 = sbr.rel (0) target = $region41
    $region40: #{tpu_custom_call.1} parent=1 // pred_region
      %78 = dma.done [#allocation6], 2048
    $region41: #{tpu_custom_call.1} parent=1 // pred_fallthru
      _
    // Predicated region
    $region42: #{tpu_custom_call.1} parent=1 // pred_check
      _
    $region43: #{tpu_custom_call.1} parent=1 // pred_check_branch
      %80 = sbr.rel (0) target = $region45
    $region44: #{tpu_custom_call.1} parent=1 // pred_region
      %81 = dma.done [#allocation9], 1024
    $region45: #{tpu_custom_call.1} parent=1 // pred_fallthru
      _
    %v83 = vld [vmem:[#allocation2] sm:$0xff]
    %v84 = vld [vmem:[#allocation2 + $0x8] sm:$0x3f]
    %v85 = vld [vmem:[#allocation2 + $0xe] sm:$0xff]
    %v86 = vld [vmem:[#allocation2 + $0x16] sm:$0x3f]
    %v87 = vld [vmem:[#allocation2 + $0x1c] sm:$0xff]
    %v88 = vld [vmem:[#allocation2 + $0x24] sm:$0x3f]
    %v89 = vld [vmem:[#allocation2 + $0x2a] sm:$0xff]
    %v90 = vld [vmem:[#allocation2 + $0x32] sm:$0x3f]
    %v91 = vld [vmem:[#allocation2 + $0x38] sm:$0xff]
    %v92 = vld [vmem:[#allocation2 + $0x40] sm:$0x3f]
    %v93 = vld [vmem:[#allocation2 + $0x46] sm:$0xff]
    %v94 = vld [vmem:[#allocation2 + $0x4e] sm:$0x3f]
    %v95 = vld [vmem:[#allocation2 + $0x54] sm:$0xff]
    %v96 = vld [vmem:[#allocation2 + $0x5c] sm:$0x3f]
    %v97 = vld [vmem:[#allocation2 + $0x62] sm:$0xff]
    %v98 = vld [vmem:[#allocation2 + $0x6a] sm:$0x3f]
    %v115 = vcombine.low %v83, %v85
    %v116 = vcombine.high %v83, %v85
    %v117 = vcombine.low %v87, %v89
    %v118 = vcombine.high %v87, %v89
    %v120 = vunpack.c.l.s4 1983009808
    %v121 = vunpack.c.0.s8 %v120
    %v122 = vlaneseq
    %v123 = vshrl.u32 %v122, 7
    %v124 = vsub.s32 %v121, %v123
    %v125 = vrot.slane %v115, %v124
    %v127 = vunpack.c.l.s4 1983009808
    %v128 = vunpack.c.0.s8 %v127
    %v129 = vlaneseq
    %v130 = vshrl.u32 %v129, 7
    %v131 = vsub.s32 %v128, %v130
    %v132 = vrot.slane %v116, %v131
    %v134 = vunpack.c.l.s4 1983009808
    %v135 = vunpack.c.0.s8 %v134
    %v136 = vlaneseq
    %v137 = vshrl.u32 %v136, 7
    %v138 = vsub.s32 %v135, %v137
    %v139 = vrot.slane %v117, %v138
    %v141 = vunpack.c.l.s4 1983009808
    %v142 = vunpack.c.0.s8 %v141
    %v143 = vlaneseq
    %v144 = vshrl.u32 %v143, 7
    %v145 = vsub.s32 %v142, %v144
    %v146 = vrot.slane %v118, %v145
    %v147 = vcombine.low %v125, %v139
    %v148 = vcombine.high %v125, %v139
    %v149 = vcombine.low %v132, %v146
    %v150 = vcombine.high %v132, %v146
    %v151 = vcombine.low %v84, %v86
    %v152 = vcombine.high %v84, %v86
    %v153 = vcombine.low %v88, %v90
    %v154 = vcombine.high %v88, %v90
    %v156 = vunpack.c.l.s4 1983009808
    %v157 = vunpack.c.0.s8 %v156
    %v158 = vlaneseq
    %v159 = vshrl.u32 %v158, 7
    %v160 = vsub.s32 %v157, %v159
    %v161 = vrot.slane %v151, %v160
    %v163 = vunpack.c.l.s4 1983009808
    %v164 = vunpack.c.0.s8 %v163
    %v165 = vlaneseq
    %v166 = vshrl.u32 %v165, 7
    %v167 = vsub.s32 %v164, %v166
    %v168 = vrot.slane %v152, %v167
    %v170 = vunpack.c.l.s4 1983009808
    %v171 = vunpack.c.0.s8 %v170
    %v172 = vlaneseq
    %v173 = vshrl.u32 %v172, 7
    %v174 = vsub.s32 %v171, %v173
    %v175 = vrot.slane %v153, %v174
    %v177 = vunpack.c.l.s4 1983009808
    %v178 = vunpack.c.0.s8 %v177
    %v179 = vlaneseq
    %v180 = vshrl.u32 %v179, 7
    %v181 = vsub.s32 %v178, %v180
    %v182 = vrot.slane %v154, %v181
    %v183 = vcombine.low %v161, %v175
    %v184 = vcombine.high %v161, %v175
    %v185 = vcombine.low %v168, %v182
    %v186 = vcombine.low %v91, %v93
    %v187 = vcombine.high %v91, %v93
    %v188 = vcombine.low %v95, %v97
    %v189 = vcombine.high %v95, %v97
    %v191 = vunpack.c.l.s4 1983009808
    %v192 = vunpack.c.0.s8 %v191
    %v193 = vlaneseq
    %v194 = vshrl.u32 %v193, 7
    %v195 = vsub.s32 %v192, %v194
    %v196 = vrot.slane %v186, %v195
    %v198 = vunpack.c.l.s4 1983009808
    %v199 = vunpack.c.0.s8 %v198
    %v200 = vlaneseq
    %v201 = vshrl.u32 %v200, 7
    %v202 = vsub.s32 %v199, %v201
    %v203 = vrot.slane %v187, %v202
    %v205 = vunpack.c.l.s4 1983009808
    %v206 = vunpack.c.0.s8 %v205
    %v207 = vlaneseq
    %v208 = vshrl.u32 %v207, 7
    %v209 = vsub.s32 %v206, %v208
    %v210 = vrot.slane %v188, %v209
    %v212 = vunpack.c.l.s4 1983009808
    %v213 = vunpack.c.0.s8 %v212
    %v214 = vlaneseq
    %v215 = vshrl.u32 %v214, 7
    %v216 = vsub.s32 %v213, %v215
    %v217 = vrot.slane %v189, %v216
    %v218 = vcombine.low %v196, %v210
    %v219 = vcombine.high %v196, %v210
    %v220 = vcombine.low %v203, %v217
    %v221 = vcombine.high %v203, %v217
    %v222 = vcombine.low %v92, %v94
    %v223 = vcombine.high %v92, %v94
    %v224 = vcombine.low %v96, %v98
    %v225 = vcombine.high %v96, %v98
    %v227 = vunpack.c.l.s4 1983009808
    %v228 = vunpack.c.0.s8 %v227
    %v229 = vlaneseq
    %v230 = vshrl.u32 %v229, 7
    %v231 = vsub.s32 %v228, %v230
    %v232 = vrot.slane %v222, %v231
    %v234 = vunpack.c.l.s4 1983009808
    %v235 = vunpack.c.0.s8 %v234
    %v236 = vlaneseq
    %v237 = vshrl.u32 %v236, 7
    %v238 = vsub.s32 %v235, %v237
    %v239 = vrot.slane %v223, %v238
    %v241 = vunpack.c.l.s4 1983009808
    %v242 = vunpack.c.0.s8 %v241
    %v243 = vlaneseq
    %v244 = vshrl.u32 %v243, 7
    %v245 = vsub.s32 %v242, %v244
    %v246 = vrot.slane %v224, %v245
    %v248 = vunpack.c.l.s4 1983009808
    %v249 = vunpack.c.0.s8 %v248
    %v250 = vlaneseq
    %v251 = vshrl.u32 %v250, 7
    %v252 = vsub.s32 %v249, %v251
    %v253 = vrot.slane %v225, %v252
    %v254 = vcombine.low %v232, %v246
    %v255 = vcombine.high %v232, %v246
    %v256 = vcombine.low %v239, %v253
    %v271 = vpack.c.bf16 %v218, %v147
    %v272 = vpack.c.bf16 %v219, %v148
    %v273 = vpack.c.bf16 %v220, %v149
    %v274 = vpack.c.bf16 %v221, %v150
    %v275 = vpack.c.bf16 %v254, %v183
    %v276 = vpack.c.bf16 %v255, %v184
    %v277 = vpack.c.bf16 %v256, %v185
    %v278 = vld [vmem:[#allocation5] sm:$0xff]
    %v279 = vld [vmem:[#allocation5 + $0x8] sm:$0xff]
    %v280 = vld [vmem:[#allocation5 + $0x10] sm:$0xff]
    %v281 = vld [vmem:[#allocation5 + $0x18] sm:$0xff]
    %v282 = vld [vmem:[#allocation5 + $0x20] sm:$0xff]
    %v283 = vld [vmem:[#allocation5 + $0x28] sm:$0xff]
    %v284 = vld [vmem:[#allocation5 + $0x30] sm:$0xff]
    %v285 = vld [vmem:[#allocation5 + $0x38] sm:$0xff]
    %v286 = vld [vmem:[#allocation5 + $0x40] sm:$0xff]
    %v287 = vld [vmem:[#allocation5 + $0x48] sm:$0xff]
    %v288 = vld [vmem:[#allocation5 + $0x50] sm:$0xff]
    %v289 = vld [vmem:[#allocation5 + $0x58] sm:$0xff]
    %v290 = vld [vmem:[#allocation5 + $0x60] sm:$0xff]
    %v291 = vld [vmem:[#allocation5 + $0x68] sm:$0xff]
    %v292 = vld [vmem:[#allocation5 + $0x70] sm:$0xff]
    %v293 = vld [vmem:[#allocation5 + $0x78] sm:$0xff]
    %v294 = vld [vmem:[#allocation5 + $0x80] sm:$0xff]
    %v295 = vld [vmem:[#allocation5 + $0x88] sm:$0xff]
    %v296 = vld [vmem:[#allocation5 + $0x90] sm:$0xff]
    %v297 = vld [vmem:[#allocation5 + $0x98] sm:$0xff]
    %v298 = vld [vmem:[#allocation5 + $0xa0] sm:$0xff]
    %v299 = vld [vmem:[#allocation5 + $0xa8] sm:$0xff]
    %v300 = vld [vmem:[#allocation5 + $0xb0] sm:$0xff]
    %v301 = vld [vmem:[#allocation5 + $0xb8] sm:$0xff]
    %v302 = vld [vmem:[#allocation5 + $0xc0] sm:$0xff]
    %v303 = vld [vmem:[#allocation5 + $0xc8] sm:$0xff]
    %v304 = vld [vmem:[#allocation5 + $0xd0] sm:$0xff]
    %v305 = vld [vmem:[#allocation5 + $0xd8] sm:$0xff]
    %v306 = vld [vmem:[#allocation5 + $0xe0] sm:$0xff]
    %v307 = vld [vmem:[#allocation5 + $0xe8] sm:$0xff]
    %v308 = vld [vmem:[#allocation5 + $0xf0] sm:$0xff]
    %v309 = vld [vmem:[#allocation5 + $0xf8] sm:$0xff]
    %v310 = vld [vmem:[#allocation5 + $0x100] sm:$0xff]
    %v311 = vld [vmem:[#allocation5 + $0x108] sm:$0xff]
    %v312 = vld [vmem:[#allocation5 + $0x110] sm:$0xff]
    %v313 = vld [vmem:[#allocation5 + $0x118] sm:$0xff]
    %v314 = vld [vmem:[#allocation5 + $0x120] sm:$0xff]
    %v315 = vld [vmem:[#allocation5 + $0x128] sm:$0xff]
    %v316 = vld [vmem:[#allocation5 + $0x130] sm:$0xff]
    %v317 = vld [vmem:[#allocation5 + $0x138] sm:$0xff]
    %v318 = vld [vmem:[#allocation5 + $0x140] sm:$0xff]
    %v319 = vld [vmem:[#allocation5 + $0x148] sm:$0xff]
    %v320 = vld [vmem:[#allocation5 + $0x150] sm:$0xff]
    %v321 = vld [vmem:[#allocation5 + $0x158] sm:$0xff]
    %v322 = vld [vmem:[#allocation5 + $0x160] sm:$0xff]
    %v323 = vld [vmem:[#allocation5 + $0x168] sm:$0xff]
    %v324 = vld [vmem:[#allocation5 + $0x170] sm:$0xff]
    %v325 = vld [vmem:[#allocation5 + $0x178] sm:$0xff]
    %v326 = vld [vmem:[#allocation5 + $0x180] sm:$0xff]
    %v327 = vld [vmem:[#allocation5 + $0x188] sm:$0xff]
    %v328 = vld [vmem:[#allocation5 + $0x190] sm:$0xff]
    %v329 = vld [vmem:[#allocation5 + $0x198] sm:$0xff]
    %v330 = vld [vmem:[#allocation5 + $0x1a0] sm:$0xff]
    %v331 = vld [vmem:[#allocation5 + $0x1a8] sm:$0xff]
    %v332 = vld [vmem:[#allocation5 + $0x1b0] sm:$0xff]
    %v333 = vld [vmem:[#allocation5 + $0x1b8] sm:$0xff]
    %v334 = vld [vmem:[#allocation5 + $0x1c0] sm:$0xff]
    %v335 = vld [vmem:[#allocation5 + $0x1c8] sm:$0xff]
    %v336 = vld [vmem:[#allocation5 + $0x1d0] sm:$0xff]
    %v337 = vld [vmem:[#allocation5 + $0x1d8] sm:$0xff]
    %v338 = vld [vmem:[#allocation5 + $0x1e0] sm:$0xff]
    %v339 = vld [vmem:[#allocation5 + $0x1e8] sm:$0xff]
    %v340 = vld [vmem:[#allocation5 + $0x1f0] sm:$0xff]
    %v341 = vld [vmem:[#allocation5 + $0x1f8] sm:$0xff]
    %v342 = vld [vmem:[#allocation5 + $0x200] sm:$0xff]
    %v343 = vld [vmem:[#allocation5 + $0x208] sm:$0xff]
    %v344 = vld [vmem:[#allocation5 + $0x210] sm:$0xff]
    %v345 = vld [vmem:[#allocation5 + $0x218] sm:$0xff]
    %v346 = vld [vmem:[#allocation5 + $0x220] sm:$0xff]
    %v347 = vld [vmem:[#allocation5 + $0x228] sm:$0xff]
    %v348 = vld [vmem:[#allocation5 + $0x230] sm:$0xff]
    %v349 = vld [vmem:[#allocation5 + $0x238] sm:$0xff]
    %v350 = vld [vmem:[#allocation5 + $0x240] sm:$0xff]
    %v351 = vld [vmem:[#allocation5 + $0x248] sm:$0xff]
    %v352 = vld [vmem:[#allocation5 + $0x250] sm:$0xff]
    %v353 = vld [vmem:[#allocation5 + $0x258] sm:$0xff]
    %v354 = vld [vmem:[#allocation5 + $0x260] sm:$0xff]
    %v355 = vld [vmem:[#allocation5 + $0x268] sm:$0xff]
    %v356 = vld [vmem:[#allocation5 + $0x270] sm:$0xff]
    %v357 = vld [vmem:[#allocation5 + $0x278] sm:$0xff]
    %v358 = vld [vmem:[#allocation5 + $0x280] sm:$0xff]
    %v359 = vld [vmem:[#allocation5 + $0x288] sm:$0xff]
    %v360 = vld [vmem:[#allocation5 + $0x290] sm:$0xff]
    %v361 = vld [vmem:[#allocation5 + $0x298] sm:$0xff]
    %v362 = vld [vmem:[#allocation5 + $0x2a0] sm:$0xff]
    %v363 = vld [vmem:[#allocation5 + $0x2a8] sm:$0xff]
    %v364 = vld [vmem:[#allocation5 + $0x2b0] sm:$0xff]
    %v365 = vld [vmem:[#allocation5 + $0x2b8] sm:$0xff]
    %v366 = vld [vmem:[#allocation5 + $0x2c0] sm:$0xff]
    %v367 = vld [vmem:[#allocation5 + $0x2c8] sm:$0xff]
    %v368 = vld [vmem:[#allocation5 + $0x2d0] sm:$0xff]
    %v369 = vld [vmem:[#allocation5 + $0x2d8] sm:$0xff]
    %v370 = vld [vmem:[#allocation5 + $0x2e0] sm:$0xff]
    %v371 = vld [vmem:[#allocation5 + $0x2e8] sm:$0xff]
    %v372 = vld [vmem:[#allocation5 + $0x2f0] sm:$0xff]
    %v373 = vld [vmem:[#allocation5 + $0x2f8] sm:$0xff]
    %v374 = vld [vmem:[#allocation5 + $0x300] sm:$0xff]
    %v375 = vld [vmem:[#allocation5 + $0x308] sm:$0xff]
    %v376 = vld [vmem:[%s2] sm:$0x3]
    %v378 = vlaneseq
    %v379 = vshrl.u32 %v378, 7
    %v380 = vsub.s32 0, %v379
    %v381 = vrot.slane %v376, %v380
    %v382 = vlaneseq
    %v383 = vshrl.u32 %v382, 7
    %v384 = vsub.s32 1, %v383
    %v385 = vrot.slane %v376, %v384
    %v486 = vunpack.c.l.b16 %v278
    %v487 = vunpack.c.h.b16 %v278
    %v488 = vunpack.c.l.b16 %v279
    %v489 = vunpack.c.h.b16 %v279
    %v490 = vunpack.c.l.b16 %v280
    %v491 = vunpack.c.h.b16 %v280
    %v492 = vunpack.c.l.b16 %v281
    %v493 = vunpack.c.h.b16 %v281
    %v494 = vunpack.c.l.b16 %v282
    %v495 = vunpack.c.h.b16 %v282
    %v496 = vunpack.c.l.b16 %v283
    %v497 = vunpack.c.h.b16 %v283
    %v498 = vunpack.c.l.b16 %v284
    %v499 = vunpack.c.h.b16 %v284
    %v500 = vunpack.c.l.b16 %v285
    %v501 = vunpack.c.h.b16 %v285
    %v502 = vunpack.c.l.b16 %v286
    %v503 = vunpack.c.h.b16 %v286
    %v504 = vunpack.c.l.b16 %v287
    %v505 = vunpack.c.h.b16 %v287
    %v506 = vunpack.c.l.b16 %v288
    %v507 = vunpack.c.h.b16 %v288
    %v508 = vunpack.c.l.b16 %v289
    %v509 = vunpack.c.h.b16 %v289
    %v510 = vunpack.c.l.b16 %v290
    %v511 = vunpack.c.h.b16 %v290
    %v512 = vunpack.c.l.b16 %v291
    %v513 = vunpack.c.h.b16 %v291
    %v514 = vunpack.c.l.b16 %v292
    %v515 = vunpack.c.h.b16 %v292
    %v516 = vunpack.c.l.b16 %v293
    %v517 = vunpack.c.h.b16 %v293
    %v518 = vunpack.c.l.b16 %v294
    %v519 = vunpack.c.h.b16 %v294
    %v520 = vunpack.c.l.b16 %v295
    %v521 = vunpack.c.h.b16 %v295
    %v522 = vunpack.c.l.b16 %v296
    %v523 = vunpack.c.h.b16 %v296
    %v524 = vunpack.c.l.b16 %v297
    %v525 = vunpack.c.h.b16 %v297
    %v526 = vunpack.c.l.b16 %v298
    %v527 = vunpack.c.h.b16 %v298
    %v528 = vunpack.c.l.b16 %v299
    %v529 = vunpack.c.h.b16 %v299
    %v530 = vunpack.c.l.b16 %v300
    %v531 = vunpack.c.h.b16 %v300
    %v532 = vunpack.c.l.b16 %v301
    %v533 = vunpack.c.h.b16 %v301
    %v534 = vunpack.c.l.b16 %v302
    %v535 = vunpack.c.h.b16 %v302
    %v536 = vunpack.c.l.b16 %v303
    %v537 = vunpack.c.h.b16 %v303
    %v538 = vunpack.c.l.b16 %v304
    %v539 = vunpack.c.h.b16 %v304
    %v540 = vunpack.c.l.b16 %v305
    %v541 = vunpack.c.h.b16 %v305
    %v542 = vunpack.c.l.b16 %v306
    %v543 = vunpack.c.h.b16 %v306
    %v544 = vunpack.c.l.b16 %v307
    %v545 = vunpack.c.h.b16 %v307
    %v546 = vunpack.c.l.b16 %v308
    %v547 = vunpack.c.h.b16 %v308
    %v548 = vunpack.c.l.b16 %v309
    %v549 = vunpack.c.h.b16 %v309
    %v550 = vunpack.c.l.b16 %v310
    %v551 = vunpack.c.h.b16 %v310
    %v552 = vunpack.c.l.b16 %v311
    %v553 = vunpack.c.h.b16 %v311
    %v554 = vunpack.c.l.b16 %v312
    %v555 = vunpack.c.h.b16 %v312
    %v556 = vunpack.c.l.b16 %v313
    %v557 = vunpack.c.h.b16 %v313
    %v558 = vunpack.c.l.b16 %v314
    %v559 = vunpack.c.h.b16 %v314
    %v560 = vunpack.c.l.b16 %v315
    %v561 = vunpack.c.h.b16 %v315
    %v562 = vunpack.c.l.b16 %v316
    %v563 = vunpack.c.h.b16 %v316
    %v564 = vunpack.c.l.b16 %v317
    %v565 = vunpack.c.h.b16 %v317
    %v566 = vunpack.c.l.b16 %v318
    %v567 = vunpack.c.h.b16 %v318
    %v568 = vunpack.c.l.b16 %v319
    %v569 = vunpack.c.h.b16 %v319
    %v570 = vunpack.c.l.b16 %v320
    %v571 = vunpack.c.h.b16 %v320
    %v572 = vunpack.c.l.b16 %v321
    %v573 = vunpack.c.h.b16 %v321
    %v574 = vunpack.c.l.b16 %v322
    %v575 = vunpack.c.h.b16 %v322
    %v576 = vunpack.c.l.b16 %v323
    %v577 = vunpack.c.h.b16 %v323
    %v578 = vunpack.c.l.b16 %v324
    %v579 = vunpack.c.h.b16 %v324
    %v580 = vunpack.c.l.b16 %v325
    %v581 = vunpack.c.h.b16 %v325
    %v582 = vunpack.c.l.b16 %v326
    %v583 = vunpack.c.h.b16 %v326
    %v584 = vunpack.c.l.b16 %v327
    %v585 = vunpack.c.h.b16 %v327
    %v586 = vunpack.c.l.b16 %v328
    %v587 = vunpack.c.h.b16 %v328
    %v588 = vunpack.c.l.b16 %v329
    %v589 = vunpack.c.h.b16 %v329
    %v590 = vunpack.c.l.b16 %v330
    %v591 = vunpack.c.h.b16 %v330
    %v592 = vunpack.c.l.b16 %v331
    %v593 = vunpack.c.h.b16 %v331
    %v594 = vunpack.c.l.b16 %v332
    %v595 = vunpack.c.h.b16 %v332
    %v596 = vunpack.c.l.b16 %v333
    %v597 = vunpack.c.h.b16 %v333
    %v598 = vunpack.c.l.b16 %v334
    %v599 = vunpack.c.h.b16 %v334
    %v600 = vunpack.c.l.b16 %v335
    %v601 = vunpack.c.h.b16 %v335
    %v602 = vunpack.c.l.b16 %v336
    %v603 = vunpack.c.h.b16 %v336
    %v604 = vunpack.c.l.b16 %v337
    %v605 = vunpack.c.h.b16 %v337
    %v606 = vunpack.c.l.b16 %v338
    %v607 = vunpack.c.h.b16 %v338
    %v608 = vunpack.c.l.b16 %v339
    %v609 = vunpack.c.h.b16 %v339
    %v610 = vunpack.c.l.b16 %v340
    %v611 = vunpack.c.h.b16 %v340
    %v612 = vunpack.c.l.b16 %v341
    %v613 = vunpack.c.h.b16 %v341
    %v614 = vunpack.c.l.b16 %v342
    %v615 = vunpack.c.h.b16 %v342
    %v616 = vunpack.c.l.b16 %v343
    %v617 = vunpack.c.h.b16 %v343
    %v618 = vunpack.c.l.b16 %v344
    %v619 = vunpack.c.h.b16 %v344
    %v620 = vunpack.c.l.b16 %v345
    %v621 = vunpack.c.h.b16 %v345
    %v622 = vunpack.c.l.b16 %v346
    %v623 = vunpack.c.h.b16 %v346
    %v624 = vunpack.c.l.b16 %v347
    %v625 = vunpack.c.h.b16 %v347
    %v626 = vunpack.c.l.b16 %v348
    %v627 = vunpack.c.h.b16 %v348
    %v628 = vunpack.c.l.b16 %v349
    %v629 = vunpack.c.h.b16 %v349
    %v630 = vunpack.c.l.b16 %v350
    %v631 = vunpack.c.h.b16 %v350
    %v632 = vunpack.c.l.b16 %v351
    %v633 = vunpack.c.h.b16 %v351
    %v634 = vunpack.c.l.b16 %v352
    %v635 = vunpack.c.h.b16 %v352
    %v636 = vunpack.c.l.b16 %v353
    %v637 = vunpack.c.h.b16 %v353
    %v638 = vunpack.c.l.b16 %v354
    %v639 = vunpack.c.h.b16 %v354
    %v640 = vunpack.c.l.b16 %v355
    %v641 = vunpack.c.h.b16 %v355
    %v642 = vunpack.c.l.b16 %v356
    %v643 = vunpack.c.h.b16 %v356
    %v644 = vunpack.c.l.b16 %v357
    %v645 = vunpack.c.h.b16 %v357
    %v646 = vunpack.c.l.b16 %v358
    %v647 = vunpack.c.h.b16 %v358
    %v648 = vunpack.c.l.b16 %v359
    %v649 = vunpack.c.h.b16 %v359
    %v650 = vunpack.c.l.b16 %v360
    %v651 = vunpack.c.h.b16 %v360
    %v652 = vunpack.c.l.b16 %v361
    %v653 = vunpack.c.h.b16 %v361
    %v654 = vunpack.c.l.b16 %v362
    %v655 = vunpack.c.h.b16 %v362
    %v656 = vunpack.c.l.b16 %v363
    %v657 = vunpack.c.h.b16 %v363
    %v658 = vunpack.c.l.b16 %v364
    %v659 = vunpack.c.h.b16 %v364
    %v660 = vunpack.c.l.b16 %v365
    %v661 = vunpack.c.h.b16 %v365
    %v662 = vunpack.c.l.b16 %v366
    %v663 = vunpack.c.h.b16 %v366
    %v664 = vunpack.c.l.b16 %v367
    %v665 = vunpack.c.h.b16 %v367
    %v666 = vunpack.c.l.b16 %v368
    %v667 = vunpack.c.h.b16 %v368
    %v668 = vunpack.c.l.b16 %v369
    %v669 = vunpack.c.h.b16 %v369
    %v670 = vunpack.c.l.b16 %v370
    %v671 = vunpack.c.h.b16 %v370
    %v672 = vunpack.c.l.b16 %v371
    %v673 = vunpack.c.h.b16 %v371
    %v674 = vunpack.c.l.b16 %v372
    %v675 = vunpack.c.h.b16 %v372
    %v676 = vunpack.c.l.b16 %v373
    %v677 = vunpack.c.h.b16 %v373
    %v678 = vunpack.c.l.b16 %v374
    %v679 = vunpack.c.h.b16 %v374
    %v680 = vunpack.c.l.b16 %v375
    %v681 = vunpack.c.h.b16 %v375
    %v682 = vpack.c.b16 %v488, %v486
    %v683 = vpack.c.b16 %v489, %v487
    %v684 = vpack.c.b16 %v492, %v490
    %v685 = vpack.c.b16 %v493, %v491
    %v686 = vpack.c.b16 %v496, %v494
    %v687 = vpack.c.b16 %v497, %v495
    %v688 = vpack.c.b16 %v500, %v498
    %v689 = vpack.c.b16 %v501, %v499
    %v690 = vpack.c.b16 %v504, %v502
    %v691 = vpack.c.b16 %v505, %v503
    %v692 = vpack.c.b16 %v508, %v506
    %v693 = vpack.c.b16 %v509, %v507
    %v694 = vpack.c.b16 %v512, %v510
    %v695 = vpack.c.b16 %v513, %v511
    %v696 = vpack.c.b16 %v516, %v514
    %v697 = vpack.c.b16 %v517, %v515
    %v698 = vpack.c.b16 %v520, %v518
    %v699 = vpack.c.b16 %v521, %v519
    %v700 = vpack.c.b16 %v524, %v522
    %v701 = vpack.c.b16 %v525, %v523
    %v702 = vpack.c.b16 %v528, %v526
    %v703 = vpack.c.b16 %v529, %v527
    %v704 = vpack.c.b16 %v532, %v530
    %v705 = vpack.c.b16 %v533, %v531
    %v706 = vpack.c.b16 %v536, %v534
    %v707 = vpack.c.b16 %v537, %v535
    %v708 = vpack.c.b16 %v540, %v538
    %v709 = vpack.c.b16 %v541, %v539
    %v710 = vpack.c.b16 %v544, %v542
    %v711 = vpack.c.b16 %v545, %v543
    %v712 = vpack.c.b16 %v548, %v546
    %v713 = vpack.c.b16 %v549, %v547
    %v714 = vpack.c.b16 %v552, %v550
    %v715 = vpack.c.b16 %v553, %v551
    %v716 = vpack.c.b16 %v556, %v554
    %v717 = vpack.c.b16 %v557, %v555
    %v718 = vpack.c.b16 %v560, %v558
    %v719 = vpack.c.b16 %v561, %v559
    %v720 = vpack.c.b16 %v564, %v562
    %v721 = vpack.c.b16 %v565, %v563
    %v722 = vpack.c.b16 %v568, %v566
    %v723 = vpack.c.b16 %v569, %v567
    %v724 = vpack.c.b16 %v572, %v570
    %v725 = vpack.c.b16 %v573, %v571
    %v726 = vpack.c.b16 %v576, %v574
    %v727 = vpack.c.b16 %v577, %v575
    %v728 = vpack.c.b16 %v580, %v578
    %v729 = vpack.c.b16 %v581, %v579
    %v730 = vpack.c.b16 %v584, %v582
    %v731 = vpack.c.b16 %v585, %v583
    %v732 = vpack.c.b16 %v588, %v586
    %v733 = vpack.c.b16 %v589, %v587
    %v734 = vpack.c.b16 %v592, %v590
    %v735 = vpack.c.b16 %v593, %v591
    %v736 = vpack.c.b16 %v596, %v594
    %v737 = vpack.c.b16 %v597, %v595
    %v738 = vpack.c.b16 %v600, %v598
    %v739 = vpack.c.b16 %v601, %v599
    %v740 = vpack.c.b16 %v604, %v602
    %v741 = vpack.c.b16 %v605, %v603
    %v742 = vpack.c.b16 %v608, %v606
    %v743 = vpack.c.b16 %v609, %v607
    %v744 = vpack.c.b16 %v612, %v610
    %v745 = vpack.c.b16 %v613, %v611
    %v746 = vpack.c.b16 %v616, %v614
    %v747 = vpack.c.b16 %v617, %v615
    %v748 = vpack.c.b16 %v620, %v618
    %v749 = vpack.c.b16 %v621, %v619
    %v750 = vpack.c.b16 %v624, %v622
    %v751 = vpack.c.b16 %v625, %v623
    %v752 = vpack.c.b16 %v628, %v626
    %v753 = vpack.c.b16 %v629, %v627
    %v754 = vpack.c.b16 %v632, %v630
    %v755 = vpack.c.b16 %v633, %v631
    %v756 = vpack.c.b16 %v636, %v634
    %v757 = vpack.c.b16 %v637, %v635
    %v758 = vpack.c.b16 %v640, %v638
    %v759 = vpack.c.b16 %v641, %v639
    %v760 = vpack.c.b16 %v644, %v642
    %v761 = vpack.c.b16 %v645, %v643
    %v762 = vpack.c.b16 %v648, %v646
    %v763 = vpack.c.b16 %v649, %v647
    %v764 = vpack.c.b16 %v652, %v650
    %v765 = vpack.c.b16 %v653, %v651
    %v766 = vpack.c.b16 %v656, %v654
    %v767 = vpack.c.b16 %v657, %v655
    %v768 = vpack.c.b16 %v660, %v658
    %v769 = vpack.c.b16 %v661, %v659
    %v770 = vpack.c.b16 %v664, %v662
    %v771 = vpack.c.b16 %v665, %v663
    %v772 = vpack.c.b16 %v668, %v666
    %v773 = vpack.c.b16 %v669, %v667
    %v774 = vpack.c.b16 %v672, %v670
    %v775 = vpack.c.b16 %v673, %v671
    %v776 = vpack.c.b16 %v676, %v674
    %v777 = vpack.c.b16 %v677, %v675
    %v778 = vpack.c.b16 %v680, %v678
    %v779 = vpack.c.b16 %v681, %v679
    %vm878 = vcmask 130048
    %v880 = vsel %vm878, %v277, 0
    %882 = vmatprep.subr.bf16.mxu0 %v683
    %883 = vmatpush1.bf16.msra.mxu0 %v682
    %884 = vmatprep.subr.bf16.mxu0 %v685
    %885 = vmatpush1.bf16.msra.mxu0 %v684
    %886 = vmatprep.subr.bf16.mxu0 %v687
    %887 = vmatpush1.bf16.msra.mxu0 %v686
    %888 = vmatprep.subr.bf16.mxu0 %v689
    %889 = vmatpush1.bf16.msra.mxu0 %v688
    %890 = vmatprep.subr.bf16.mxu0 %v691
    %891 = vmatpush1.bf16.msra.mxu0 %v690
    %892 = vmatprep.subr.bf16.mxu0 %v693
    %893 = vmatpush1.bf16.msra.mxu0 %v692
    %894 = vmatprep.subr.bf16.mxu0 %v695
    %895 = vmatpush1.bf16.msra.mxu0 %v694
    %896 = vmatprep.subr.bf16.mxu0 %v697
    %897 = vmatpush1.bf16.msra.mxu0 %v696
    %898 = vmatprep.subr.bf16.mxu0 %v699
    %899 = vmatpush1.bf16.msra.mxu0 %v698
    %900 = vmatprep.subr.bf16.mxu0 %v701
    %901 = vmatpush1.bf16.msra.mxu0 %v700
    %902 = vmatprep.subr.bf16.mxu0 %v703
    %903 = vmatpush1.bf16.msra.mxu0 %v702
    %904 = vmatprep.subr.bf16.mxu0 %v705
    %905 = vmatpush1.bf16.msra.mxu0 %v704
    %906 = vmatprep.subr.bf16.mxu0 %v707
    %907 = vmatpush1.bf16.msra.mxu0 %v706
    %908 = vmatprep.subr.bf16.mxu0 %v709
    %909 = vmatpush1.bf16.msra.mxu0 %v708
    %910 = vmatprep.subr.bf16.mxu0 %v711
    %911 = vmatpush1.bf16.msra.mxu0 %v710
    %912 = vmatprep.subr.bf16.mxu0 %v713
    %913 = vmatpush1.bf16.msra.mxu0 %v712
    %914 = vmatprep.mubr.bf16.mxu0 %v272
    %915 = vmatmul.mubr.bf16.gmra.mrb[0].mxu0 %v271
    %v916 = vpop.f32.mrb[0].mxu0
    %v917 = vadd.f32 %v381, %v916
    %v918 = vpop.f32.mrb[0].mxu0
    %v919 = vadd.f32 %v385, %v918
    %v920 = vpop.f32.mrb[0].mxu0
    %v921 = vadd.f32 %v381, %v920
    %v922 = vpop.f32.mrb[0].mxu0
    %v923 = vadd.f32 %v385, %v922
    %924 = vdwg.mxu0
    %925 = vmatprep.subr.bf16.mxu0 %v715
    %926 = vmatpush1.bf16.msra.mxu0 %v714
    %927 = vmatprep.subr.bf16.mxu0 %v717
    %928 = vmatpush1.bf16.msra.mxu0 %v716
    %929 = vmatprep.subr.bf16.mxu0 %v719
    %930 = vmatpush1.bf16.msra.mxu0 %v718
    %931 = vmatprep.subr.bf16.mxu0 %v721
    %932 = vmatpush1.bf16.msra.mxu0 %v720
    %933 = vmatprep.subr.bf16.mxu0 %v723
    %934 = vmatpush1.bf16.msra.mxu0 %v722
    %935 = vmatprep.subr.bf16.mxu0 %v725
    %936 = vmatpush1.bf16.msra.mxu0 %v724
    %937 = vmatprep.subr.bf16.mxu0 %v727
    %938 = vmatpush1.bf16.msra.mxu0 %v726
    %939 = vmatprep.subr.bf16.mxu0 %v729
    %940 = vmatpush1.bf16.msra.mxu0 %v728
    %941 = vmatprep.subr.bf16.mxu0 %v731
    %942 = vmatpush1.bf16.msra.mxu0 %v730
    %943 = vmatprep.subr.bf16.mxu0 %v733
    %944 = vmatpush1.bf16.msra.mxu0 %v732
    %945 = vmatprep.subr.bf16.mxu0 %v735
    %946 = vmatpush1.bf16.msra.mxu0 %v734
    %947 = vmatprep.subr.bf16.mxu0 %v737
    %948 = vmatpush1.bf16.msra.mxu0 %v736
    %949 = vmatprep.subr.bf16.mxu0 %v739
    %950 = vmatpush1.bf16.msra.mxu0 %v738
    %951 = vmatprep.subr.bf16.mxu0 %v741
    %952 = vmatpush1.bf16.msra.mxu0 %v740
    %953 = vmatprep.subr.bf16.mxu0 %v743
    %954 = vmatpush1.bf16.msra.mxu0 %v742
    %955 = vmatprep.subr.bf16.mxu0 %v745
    %956 = vmatpush1.bf16.msra.mxu0 %v744
    %957 = vmatprep.mubr.bf16.mxu0 %v274
    %958 = vmatmul.mubr.bf16.gmra.mrb[0].mxu0 %v273
    %v959 = vpop.f32.mrb[0].mxu0
    %v960 = vadd.f32 %v917, %v959
    %v961 = vpop.f32.mrb[0].mxu0
    %v962 = vadd.f32 %v919, %v961
    %v963 = vpop.f32.mrb[0].mxu0
    %v964 = vadd.f32 %v921, %v963
    %v965 = vpop.f32.mrb[0].mxu0
    %v966 = vadd.f32 %v923, %v965
    %967 = vdwg.mxu0
    %968 = vmatprep.subr.bf16.mxu0 %v747
    %969 = vmatpush1.bf16.msra.mxu0 %v746
    %970 = vmatprep.subr.bf16.mxu0 %v749
    %971 = vmatpush1.bf16.msra.mxu0 %v748
    %972 = vmatprep.subr.bf16.mxu0 %v751
    %973 = vmatpush1.bf16.msra.mxu0 %v750
    %974 = vmatprep.subr.bf16.mxu0 %v753
    %975 = vmatpush1.bf16.msra.mxu0 %v752
    %976 = vmatprep.subr.bf16.mxu0 %v755
    %977 = vmatpush1.bf16.msra.mxu0 %v754
    %978 = vmatprep.subr.bf16.mxu0 %v757
    %979 = vmatpush1.bf16.msra.mxu0 %v756
    %980 = vmatprep.subr.bf16.mxu0 %v759
    %981 = vmatpush1.bf16.msra.mxu0 %v758
    %982 = vmatprep.subr.bf16.mxu0 %v761
    %983 = vmatpush1.bf16.msra.mxu0 %v760
    %984 = vmatprep.subr.bf16.mxu0 %v763
    %985 = vmatpush1.bf16.msra.mxu0 %v762
    %986 = vmatprep.subr.bf16.mxu0 %v765
    %987 = vmatpush1.bf16.msra.mxu0 %v764
    %988 = vmatprep.subr.bf16.mxu0 %v767
    %989 = vmatpush1.bf16.msra.mxu0 %v766
    %990 = vmatprep.subr.bf16.mxu0 %v769
    %991 = vmatpush1.bf16.msra.mxu0 %v768
    %992 = vmatprep.subr.bf16.mxu0 %v771
    %993 = vmatpush1.bf16.msra.mxu0 %v770
    %994 = vmatprep.subr.bf16.mxu0 %v773
    %995 = vmatpush1.bf16.msra.mxu0 %v772
    %996 = vmatprep.subr.bf16.mxu0 %v775
    %997 = vmatpush1.bf16.msra.mxu0 %v774
    %998 = vmatprep.subr.bf16.mxu0 %v777
    %999 = vmatpush1.bf16.msra.mxu0 %v776
    %1000 = vmatprep.mubr.bf16.mxu0 %v276
    %1001 = vmatmul.mubr.bf16.gmra.mrb[0].mxu0 %v275
    %v1002 = vpop.f32.mrb[0].mxu0
    %v1003 = vadd.f32 %v960, %v1002
    %v1004 = vpop.f32.mrb[0].mxu0
    %v1005 = vadd.f32 %v962, %v1004
    %v1006 = vpop.f32.mrb[0].mxu0
    %v1007 = vadd.f32 %v964, %v1006
    %v1008 = vpop.f32.mrb[0].mxu0
    %v1009 = vadd.f32 %v966, %v1008
    %1010 = vdwg.mxu0
    %1011 = vmatprep.subr.bf16.mxu0 %v779
    %1012 = vmatpush1.bf16.msra.mxu0 %v778
    %1013 = vmatprep.subr.bf16.mxu0 0
    %1014 = vmatpush1.bf16.msra.mxu0 0
    %1015 = vmatprep.subr.bf16.mxu0 0
    %1016 = vmatpush1.bf16.msra.mxu0 0
    %1017 = vmatprep.subr.bf16.mxu0 0
    %1018 = vmatpush1.bf16.msra.mxu0 0
    %1019 = vmatprep.subr.bf16.mxu0 0
    %1020 = vmatpush1.bf16.msra.mxu0 0
    %1021 = vmatprep.subr.bf16.mxu0 0
    %1022 = vmatpush1.bf16.msra.mxu0 0
    %1023 = vmatprep.subr.bf16.mxu0 0
    %1024 = vmatpush1.bf16.msra.mxu0 0
    %1025 = vmatprep.subr.bf16.mxu0 0
    %1026 = vmatpush1.bf16.msra.mxu0 0
    %1027 = vmatprep.subr.bf16.mxu0 0
    %1028 = vmatpush1.bf16.msra.mxu0 0
    %1029 = vmatprep.subr.bf16.mxu0 0
    %1030 = vmatpush1.bf16.msra.mxu0 0
    %1031 = vmatprep.subr.bf16.mxu0 0
    %1032 = vmatpush1.bf16.msra.mxu0 0
    %1033 = vmatprep.subr.bf16.mxu0 0
    %1034 = vmatpush1.bf16.msra.mxu0 0
    %1035 = vmatprep.subr.bf16.mxu0 0
    %1036 = vmatpush1.bf16.msra.mxu0 0
    %1037 = vmatprep.subr.bf16.mxu0 0
    %1038 = vmatpush1.bf16.msra.mxu0 0
    %1039 = vmatprep.subr.bf16.mxu0 0
    %1040 = vmatpush1.bf16.msra.mxu0 0
    %1041 = vmatprep.subr.bf16.mxu0 0
    %1042 = vmatpush1.bf16.msra.mxu0 0
    %1043 = vmatprep.mubr.bf16.mxu0 0
    %1044 = vmatmul.mubr.bf16.gmra.mrb[0].mxu0 %v880
    %v1045 = vpop.f32.mrb[0].mxu0
    %v1046 = vadd.f32 %v1003, %v1045
    %v1047 = vpop.f32.mrb[0].mxu0
    %v1048 = vadd.f32 %v1005, %v1047
    %v1049 = vpop.f32.mrb[0].mxu0
    %v1050 = vadd.f32 %v1007, %v1049
    %v1051 = vpop.f32.mrb[0].mxu0
    %v1052 = vadd.f32 %v1009, %v1051
    %1053 = vdwg.mxu0
    %v1054 = vmax.f32 %v1046, 0.0
    %v1055 = vmax.f32 %v1048, 0.0
    %v1056 = vmax.f32 %v1050, 0.0
    %v1057 = vmax.f32 %v1052, 0.0
    %v1058 = vpack.c.bf16 %v1056, %v1054
    %v1059 = vpack.c.bf16 %v1057, %v1055
    %v1060 = vld [vmem:[#allocation7] sm:$0xf]
    %v1061 = vld [vmem:[#allocation7 + $0x4] sm:$0xf]
    %v1062 = vld [vmem:[#allocation7 + $0x8] sm:$0xf]
    %v1063 = vld [vmem:[#allocation7 + $0xc] sm:$0xf]
    %v1064 = vld [vmem:[#allocation7 + $0x10] sm:$0xf]
    %v1065 = vld [vmem:[#allocation7 + $0x14] sm:$0xf]
    %v1066 = vld [vmem:[#allocation7 + $0x18] sm:$0xf]
    %v1067 = vld [vmem:[#allocation7 + $0x1c] sm:$0xf]
    %v1068 = vld [vmem:[#allocation7 + $0x20] sm:$0xf]
    %v1069 = vld [vmem:[#allocation7 + $0x24] sm:$0xf]
    %v1070 = vld [vmem:[#allocation7 + $0x28] sm:$0xf]
    %v1071 = vld [vmem:[#allocation7 + $0x2c] sm:$0xf]
    %v1072 = vld [vmem:[#allocation7 + $0x30] sm:$0xf]
    %v1073 = vld [vmem:[#allocation7 + $0x34] sm:$0xf]
    %v1074 = vld [vmem:[#allocation7 + $0x38] sm:$0xf]
    %v1075 = vld [vmem:[#allocation7 + $0x3c] sm:$0xf]
    %v1076 = vld [vmem:[#allocation7 + $0x40] sm:$0xf]
    %v1077 = vld [vmem:[#allocation7 + $0x44] sm:$0xf]
    %v1078 = vld [vmem:[#allocation7 + $0x48] sm:$0xf]
    %v1079 = vld [vmem:[#allocation7 + $0x4c] sm:$0xf]
    %v1080 = vld [vmem:[#allocation7 + $0x50] sm:$0xf]
    %v1081 = vld [vmem:[#allocation7 + $0x54] sm:$0xf]
    %v1082 = vld [vmem:[#allocation7 + $0x58] sm:$0xf]
    %v1083 = vld [vmem:[#allocation7 + $0x5c] sm:$0xf]
    %v1084 = vld [vmem:[#allocation7 + $0x60] sm:$0xf]
    %v1085 = vld [vmem:[#allocation7 + $0x64] sm:$0xf]
    %v1086 = vld [vmem:[#allocation7 + $0x68] sm:$0xf]
    %v1087 = vld [vmem:[#allocation7 + $0x6c] sm:$0xf]
    %v1088 = vld [vmem:[#allocation7 + $0x70] sm:$0xf]
    %v1089 = vld [vmem:[#allocation7 + $0x74] sm:$0xf]
    %v1090 = vld [vmem:[#allocation7 + $0x78] sm:$0xf]
    %v1091 = vld [vmem:[#allocation7 + $0x7c] sm:$0xf]
    %v1092 = vld [vmem:[%s4] sm:$0x1]
    %v1094 = vlaneseq
    %v1095 = vshrl.u32 %v1094, 7
    %v1096 = vsub.s32 0, %v1095
    %v1097 = vrot.slane %v1092, %v1096
    %v1131 = vunpack.c.l.b16 %v1060
    %v1132 = vunpack.c.l.b16 %v1061
    %v1133 = vunpack.c.l.b16 %v1062
    %v1134 = vunpack.c.l.b16 %v1063
    %v1135 = vunpack.c.l.b16 %v1064
    %v1136 = vunpack.c.l.b16 %v1065
    %v1137 = vunpack.c.l.b16 %v1066
    %v1138 = vunpack.c.l.b16 %v1067
    %v1139 = vunpack.c.l.b16 %v1068
    %v1140 = vunpack.c.l.b16 %v1069
    %v1141 = vunpack.c.l.b16 %v1070
    %v1142 = vunpack.c.l.b16 %v1071
    %v1143 = vunpack.c.l.b16 %v1072
    %v1144 = vunpack.c.l.b16 %v1073
    %v1145 = vunpack.c.l.b16 %v1074
    %v1146 = vunpack.c.l.b16 %v1075
    %v1147 = vunpack.c.l.b16 %v1076
    %v1148 = vunpack.c.l.b16 %v1077
    %v1149 = vunpack.c.l.b16 %v1078
    %v1150 = vunpack.c.l.b16 %v1079
    %v1151 = vunpack.c.l.b16 %v1080
    %v1152 = vunpack.c.l.b16 %v1081
    %v1153 = vunpack.c.l.b16 %v1082
    %v1154 = vunpack.c.l.b16 %v1083
    %v1155 = vunpack.c.l.b16 %v1084
    %v1156 = vunpack.c.l.b16 %v1085
    %v1157 = vunpack.c.l.b16 %v1086
    %v1158 = vunpack.c.l.b16 %v1087
    %v1159 = vunpack.c.l.b16 %v1088
    %v1160 = vunpack.c.l.b16 %v1089
    %v1161 = vunpack.c.l.b16 %v1090
    %v1162 = vunpack.c.l.b16 %v1091
    %v1163 = vpack.c.b16 %v1132, %v1131
    %v1164 = vpack.c.b16 %v1134, %v1133
    %v1165 = vpack.c.b16 %v1136, %v1135
    %v1166 = vpack.c.b16 %v1138, %v1137
    %v1167 = vpack.c.b16 %v1140, %v1139
    %v1168 = vpack.c.b16 %v1142, %v1141
    %v1169 = vpack.c.b16 %v1144, %v1143
    %v1170 = vpack.c.b16 %v1146, %v1145
    %v1171 = vpack.c.b16 %v1148, %v1147
    %v1172 = vpack.c.b16 %v1150, %v1149
    %v1173 = vpack.c.b16 %v1152, %v1151
    %v1174 = vpack.c.b16 %v1154, %v1153
    %v1175 = vpack.c.b16 %v1156, %v1155
    %v1176 = vpack.c.b16 %v1158, %v1157
    %v1177 = vpack.c.b16 %v1160, %v1159
    %v1178 = vpack.c.b16 %v1162, %v1161
    %1195 = vmatprep.subr.bf16.mxu0 0
    %1196 = vmatpush1.bf16.msra.mxu0 %v1163
    %1197 = vmatprep.subr.bf16.mxu0 0
    %1198 = vmatpush1.bf16.msra.mxu0 %v1164
    %1199 = vmatprep.subr.bf16.mxu0 0
    %1200 = vmatpush1.bf16.msra.mxu0 %v1165
    %1201 = vmatprep.subr.bf16.mxu0 0
    %1202 = vmatpush1.bf16.msra.mxu0 %v1166
    %1203 = vmatprep.subr.bf16.mxu0 0
    %1204 = vmatpush1.bf16.msra.mxu0 %v1167
    %1205 = vmatprep.subr.bf16.mxu0 0
    %1206 = vmatpush1.bf16.msra.mxu0 %v1168
    %1207 = vmatprep.subr.bf16.mxu0 0
    %1208 = vmatpush1.bf16.msra.mxu0 %v1169
    %1209 = vmatprep.subr.bf16.mxu0 0
    %1210 = vmatpush1.bf16.msra.mxu0 %v1170
    %1211 = vmatprep.subr.bf16.mxu0 0
    %1212 = vmatpush1.bf16.msra.mxu0 %v1171
    %1213 = vmatprep.subr.bf16.mxu0 0
    %1214 = vmatpush1.bf16.msra.mxu0 %v1172
    %1215 = vmatprep.subr.bf16.mxu0 0
    %1216 = vmatpush1.bf16.msra.mxu0 %v1173
    %1217 = vmatprep.subr.bf16.mxu0 0
    %1218 = vmatpush1.bf16.msra.mxu0 %v1174
    %1219 = vmatprep.subr.bf16.mxu0 0
    %1220 = vmatpush1.bf16.msra.mxu0 %v1175
    %1221 = vmatprep.subr.bf16.mxu0 0
    %1222 = vmatpush1.bf16.msra.mxu0 %v1176
    %1223 = vmatprep.subr.bf16.mxu0 0
    %1224 = vmatpush1.bf16.msra.mxu0 %v1177
    %1225 = vmatprep.subr.bf16.mxu0 0
    %1226 = vmatpush1.bf16.msra.mxu0 %v1178
    %1227 = vmatprep.mubr.bf16.mxu0 %v1059
    %1228 = vmatmul.mubr.bf16.gmra.mrb[0].mxu0 %v1058
    %v1229 = vpop.f32.mrb[0].mxu0
    %v1230 = vadd.f32 %v1097, %v1229
    %v1231 = vpop.f32.mrb[0].mxu0
    %v1232 = vpop.f32.mrb[0].mxu0
    %v1233 = vadd.f32 %v1097, %v1232
    %v1234 = vpop.f32.mrb[0].mxu0
    %1235 = vdwg.mxu0
    %v1236 = vmax.f32 %v1230, 0.0
    %v1237 = vmax.f32 %v1233, 0.0
    %v1238 = vpack.c.bf16 %v1237, %v1236
    %v1239 = vld [vmem:[#allocation8] sm:$0xf]
    %v1240 = vld [vmem:[#allocation8 + $0x4] sm:$0xf]
    %v1241 = vld [vmem:[#allocation8 + $0x8] sm:$0xf]
    %v1242 = vld [vmem:[#allocation8 + $0xc] sm:$0xf]
    %v1243 = vld [vmem:[#allocation8 + $0x10] sm:$0xf]
    %v1244 = vld [vmem:[#allocation8 + $0x14] sm:$0xf]
    %v1245 = vld [vmem:[#allocation8 + $0x18] sm:$0xf]
    %v1246 = vld [vmem:[#allocation8 + $0x1c] sm:$0xf]
    %v1247 = vld [vmem:[#allocation8 + $0x20] sm:$0xf]
    %v1248 = vld [vmem:[#allocation8 + $0x24] sm:$0xf]
    %v1249 = vld [vmem:[#allocation8 + $0x28] sm:$0xf]
    %v1250 = vld [vmem:[#allocation8 + $0x2c] sm:$0xf]
    %v1251 = vld [vmem:[#allocation8 + $0x30] sm:$0xf]
    %v1252 = vld [vmem:[#allocation8 + $0x34] sm:$0xf]
    %v1253 = vld [vmem:[#allocation8 + $0x38] sm:$0xf]
    %v1254 = vld [vmem:[#allocation8 + $0x3c] sm:$0xf]
    %v1255 = vld [vmem:[%s6] sm:$0x1]
    %v1257 = vlaneseq
    %v1258 = vshrl.u32 %v1257, 7
    %v1259 = vsub.s32 0, %v1258
    %v1260 = vrot.slane %v1255, %v1259
    %v1278 = vunpack.c.l.b16 %v1239
    %v1279 = vunpack.c.l.b16 %v1240
    %v1280 = vunpack.c.l.b16 %v1241
    %v1281 = vunpack.c.l.b16 %v1242
    %v1282 = vunpack.c.l.b16 %v1243
    %v1283 = vunpack.c.l.b16 %v1244
    %v1284 = vunpack.c.l.b16 %v1245
    %v1285 = vunpack.c.l.b16 %v1246
    %v1286 = vunpack.c.l.b16 %v1247
    %v1287 = vunpack.c.l.b16 %v1248
    %v1288 = vunpack.c.l.b16 %v1249
    %v1289 = vunpack.c.l.b16 %v1250
    %v1290 = vunpack.c.l.b16 %v1251
    %v1291 = vunpack.c.l.b16 %v1252
    %v1292 = vunpack.c.l.b16 %v1253
    %v1293 = vunpack.c.l.b16 %v1254
    %v1294 = vpack.c.b16 %v1279, %v1278
    %v1295 = vpack.c.b16 %v1281, %v1280
    %v1296 = vpack.c.b16 %v1283, %v1282
    %v1297 = vpack.c.b16 %v1285, %v1284
    %v1298 = vpack.c.b16 %v1287, %v1286
    %v1299 = vpack.c.b16 %v1289, %v1288
    %v1300 = vpack.c.b16 %v1291, %v1290
    %v1301 = vpack.c.b16 %v1293, %v1292
    %1310 = vmatprep.subr.bf16.mxu0 0
    %1311 = vmatpush1.bf16.msra.mxu0 %v1294
    %1312 = vmatprep.subr.bf16.mxu0 0
    %1313 = vmatpush1.bf16.msra.mxu0 %v1295
    %1314 = vmatprep.subr.bf16.mxu0 0
    %1315 = vmatpush1.bf16.msra.mxu0 %v1296
    %1316 = vmatprep.subr.bf16.mxu0 0
    %1317 = vmatpush1.bf16.msra.mxu0 %v1297
    %1318 = vmatprep.subr.bf16.mxu0 0
    %1319 = vmatpush1.bf16.msra.mxu0 %v1298
    %1320 = vmatprep.subr.bf16.mxu0 0
    %1321 = vmatpush1.bf16.msra.mxu0 %v1299
    %1322 = vmatprep.subr.bf16.mxu0 0
    %1323 = vmatpush1.bf16.msra.mxu0 %v1300
    %1324 = vmatprep.subr.bf16.mxu0 0
    %1325 = vmatpush1.bf16.msra.mxu0 %v1301
    %1326 = vmatprep.subr.bf16.mxu0 0
    %1327 = vmatpush1.bf16.msra.mxu0 0
    %1328 = vmatprep.subr.bf16.mxu0 0
    %1329 = vmatpush1.bf16.msra.mxu0 0
    %1330 = vmatprep.subr.bf16.mxu0 0
    %1331 = vmatpush1.bf16.msra.mxu0 0
    %1332 = vmatprep.subr.bf16.mxu0 0
    %1333 = vmatpush1.bf16.msra.mxu0 0
    %1334 = vmatprep.subr.bf16.mxu0 0
    %1335 = vmatpush1.bf16.msra.mxu0 0
    %1336 = vmatprep.subr.bf16.mxu0 0
    %1337 = vmatpush1.bf16.msra.mxu0 0
    %1338 = vmatprep.subr.bf16.mxu0 0
    %1339 = vmatpush1.bf16.msra.mxu0 0
    %1340 = vmatprep.subr.bf16.mxu0 0
    %1341 = vmatpush1.bf16.msra.mxu0 0
    %1342 = vmatprep.mubr.bf16.mxu0 0
    %1343 = vmatmul.mubr.bf16.gmra.mrb[0].mxu0 %v1238
    %v1344 = vpop.f32.mrb[0].mxu0
    %v1345 = vadd.f32 %v1260, %v1344
    %v1346 = vpop.f32.mrb[0].mxu0
    %v1347 = vpop.f32.mrb[0].mxu0
    %v1348 = vadd.f32 %v1260, %v1347
    %v1349 = vpop.f32.mrb[0].mxu0
    %1350 = vdwg.mxu0
    %v1351 = vpack.c.bf16 %v1348, %v1345
    %v1353 = vcombine.high %v1351, %v1351
    %v1355 = vunpack.c.l.s4 1966171168
    %v1356 = vunpack.c.0.s8 %v1355
    %v1357 = vlaneseq
    %v1358 = vshrl.u32 %v1357, 7
    %v1359 = vsub.s32 %v1356, %v1358
    %v1360 = vrot.slane %v1351, %v1359
    %v1362 = vunpack.c.l.s4 1966171168
    %v1363 = vunpack.c.0.s8 %v1362
    %v1364 = vlaneseq
    %v1365 = vshrl.u32 %v1364, 7
    %v1366 = vsub.s32 %v1363, %v1365
    %v1367 = vrot.slane %v1353, %v1366
    %v1368 = vcombine.high %v1360, %v1360
    %v1369 = vcombine.high %v1367, %v1367
    %v1371 = vunpack.c.l.s4 1966171168
    %v1372 = vunpack.c.0.s8 %v1371
    %v1373 = vlaneseq
    %v1374 = vshrl.u32 %v1373, 7
    %v1375 = vsub.s32 %v1372, %v1374
    %v1376 = vrot.slane %v1360, %v1375
    %v1378 = vunpack.c.l.s4 1966171168
    %v1379 = vunpack.c.0.s8 %v1378
    %v1380 = vlaneseq
    %v1381 = vshrl.u32 %v1380, 7
    %v1382 = vsub.s32 %v1379, %v1381
    %v1383 = vrot.slane %v1367, %v1382
    %v1385 = vunpack.c.l.s4 1966171168
    %v1386 = vunpack.c.0.s8 %v1385
    %v1387 = vlaneseq
    %v1388 = vshrl.u32 %v1387, 7
    %v1389 = vsub.s32 %v1386, %v1388
    %v1390 = vrot.slane %v1368, %v1389
    %v1392 = vunpack.c.l.s4 1966171168
    %v1393 = vunpack.c.0.s8 %v1392
    %v1394 = vlaneseq
    %v1395 = vshrl.u32 %v1394, 7
    %v1396 = vsub.s32 %v1393, %v1395
    %v1397 = vrot.slane %v1369, %v1396
    %v1398 = vcombine.high %v1376, %v1376
    %v1399 = vcombine.high %v1383, %v1383
    %v1400 = vcombine.high %v1390, %v1390
    %v1401 = vcombine.high %v1397, %v1397
    %1410 = vst [vmem:[#allocation10] sm:$0x1] %v1376
    %1411 = vst [vmem:[#allocation10 + $0x1] sm:$0x1] %v1390
    %1412 = vst [vmem:[#allocation10 + $0x2] sm:$0x1] %v1398
    %1413 = vst [vmem:[#allocation10 + $0x3] sm:$0x1] %v1400
    %1414 = vst [vmem:[#allocation10 + $0x4] sm:$0x1] %v1383
    %1415 = vst [vmem:[#allocation10 + $0x5] sm:$0x1] %v1397
    %1416 = vst [vmem:[#allocation10 + $0x6] sm:$0x1] %v1399
    %1417 = vst [vmem:[#allocation10 + $0x7] sm:$0x1] %v1401
    // Predicated region
    $region46: #{tpu_custom_call.1} parent=1 // pred_check
      _
    $region47: #{tpu_custom_call.1} parent=1 // pred_check_branch
      %1419 = sbr.rel (0) target = $region49
    $region48: #{tpu_custom_call.1} parent=1 // pred_region
      %s1421 = ssub.s32 128, 16
      %1422 = vsyncadd [#allocation4], %s1421
      %s1423 = sshll.u32 [#allocation10], 4
      %s1424 = int_to_ptr.vmem [resolvable:$true] %s1423
      %1429 = dma.vmem_to_hbm [thread:$0]  %s1424, 16, %s7, [#allocation4], 16, 16, 1
    $region49: #{tpu_custom_call.1} parent=1 // pred_fallthru
      _
    // Predicated region
    $region50: #{tpu_custom_call.1} parent=1 // pred_check
      _
    $region51: #{tpu_custom_call.1} parent=1 // pred_check_branch
      %1431 = sbr.rel (0) target = $region53
    $region52: #{tpu_custom_call.1} parent=1 // pred_region
      %1432 = dma.done [#allocation4], 128
    $region53: #{tpu_custom_call.1} parent=1 // pred_fallthru
      _
    %1433 = vsyncpa [#allocation3], 1
    %1434 = vsyncpa [#allocation6], 1
    %1435 = vsyncpa [#allocation9], 1
    %1436 = vsyncpa [#allocation4], 1

</llo_original>
